<compile_context>
chip_gen: v5e
topology: v5e:2x2
jax: 0.10.0
libtpu: 0.0.40
codegen_flags: <defaults>
</compile_context>

<pallas_src>
import jax
import jax.numpy as jnp
from jax.experimental import pallas as pl
from jax.experimental.pallas import tpu as pltpu

_SUBLANES = 8   # f32 sublane tile
_LANES = 128    # lane tile


def _num_predictor_kernel(x_ref, w_ref, b_ref, o_ref):
    # x_ref: (TM, D) rows of x     w_ref: (8, D) weight row replicated
    # b_ref: (1, 1) bias           o_ref: (1, TM) lane-dense output slab
    x = x_ref[...].astype(jnp.float32)
    w = w_ref[...].astype(jnp.float32)
    # MXU: (8, D) @ (D, TM) -> (8, TM); row index lands in the lane dim so the
    # store below is a dense unmasked vst (all 8 result rows are identical).
    y = jnp.dot(w, x.T, preferred_element_type=jnp.float32)
    y = y[0:1, :] + b_ref[...].astype(jnp.float32)       # (1, TM) + (1, 1)
    o_ref[...] = jnp.maximum(y, 0.0).astype(o_ref.dtype)


def num_predictor_forward(x, weight, bias, *, block_rows=32768):
    """relu(x @ weight.T + bias). x: (N, D), weight: (1, D), bias: (1,) -> (N, 1)."""
    n, d = x.shape

    # Single full-extent block for small N (always legal); otherwise a
    # lane-aligned (multiple of 128) row tile so the (1, TM) output block is
    # dense and the (TM, D) input block is sublane-aligned.
    if n <= block_rows:
        tm = n
    else:
        tm = max(_LANES, (min(block_rows, n) // _LANES) * _LANES)

    grid = (pl.cdiv(n, tm),)

    w8 = jnp.broadcast_to(weight.reshape(1, d), (_SUBLANES, d))  # MXU-friendly LHS
    b2d = bias.reshape(1, 1)

    out_row = pl.pallas_call(
        _num_predictor_kernel,
        out_shape=jax.ShapeDtypeStruct((1, n), x.dtype),
        grid_spec=pltpu.PrefetchScalarGridSpec(
            num_scalar_prefetch=0,
            grid=grid,
            in_specs=[
                pl.BlockSpec((tm, d), lambda i: (i, 0)),          # stream rows of x
                pl.BlockSpec((_SUBLANES, d), lambda i: (0, 0)),   # weight resident
                pl.BlockSpec((1, 1), lambda i: (0, 0)),           # bias resident
            ],
            out_specs=pl.BlockSpec((1, tm), lambda i: (0, i)),    # lane-dense slab
        ),
        compiler_params=pltpu.CompilerParams(
            dimension_semantics=("parallel",),
            vmem_limit_bytes=32 * 1024 * 1024,
        ),
    )(x, w8, b2d)

    # (1, N) -> (N, 1): same linear order, tiny relayout vs. the streamed input.
    return out_row.reshape(n, 1)


if __name__ == "__main__":
    latent_dim = 32
    batch = 8

    key = jax.random.PRNGKey(0)
    kx, kw, kb = jax.random.split(key, 3)

    # Deterministic synthetic parameters (shapes from nn.Linear(latent_dim, 1)).
    x = jax.random.normal(kx, (batch, latent_dim), dtype=jnp.float32)
    weight = jax.random.normal(kw, (1, latent_dim), dtype=jnp.float32) * 0.1
    bias = jax.random.normal(kb, (1,), dtype=jnp.float32) * 0.1

    out = jax.block_until_ready(num_predictor_forward(x, weight, bias))

    # Reference check in plain JAX (same semantics as F.relu(nn.Linear(x))).
    ref = jnp.maximum(x @ weight.T + bias, 0.0)
    assert out.shape == (batch, 1)
    assert jnp.allclose(out, ref, atol=1e-5, rtol=1e-5)

    # Also exercise the tiled path (multiple grid steps, ragged tail).
    n_big = 1000
    xb = jax.random.normal(kx, (n_big, latent_dim), dtype=jnp.float32)
    out_big = jax.block_until_ready(
        num_predictor_forward(xb, weight, bias, block_rows=256)
    )
    ref_big = jnp.maximum(xb @ weight.T + bias, 0.0)
    assert out_big.shape == (n_big, 1)
    assert jnp.allclose(out_big, ref_big, atol=1e-5, rtol=1e-5)

    print("KERNEL_OK")
</pallas_src>

<mosaic_0001>
module attributes {stable_mosaic.version = 11 : i64} {
  func.func @_num_predictor_kernel(%arg0: i32, %arg1: memref<8x32xf32, #tpu.memory_space<vmem>>, %arg2: memref<8x32xf32, #tpu.memory_space<vmem>>, %arg3: memref<1x1xf32, #tpu.memory_space<vmem>>, %arg4: memref<1x8xf32, #tpu.memory_space<vmem>>) attributes {dimension_semantics = [#tpu.dimension_semantics<parallel>], iteration_bounds = array<i64: 1>, scalar_prefetch = 0 : i64, scratch_operands = 0 : i64, tpu.core_type = #tpu.core_type<tc>, window_params = [{transform_indices = @transform_0, window_bounds = array<i64: 8, 32>}, {pipeline_mode = #tpu.pipeline_mode<synchronous>, transform_indices = @transform_1, window_bounds = array<i64: 8, 32>}, {pipeline_mode = #tpu.pipeline_mode<synchronous>, transform_indices = @transform_2, window_bounds = array<i64: 1, 1>}, {transform_indices = @transform_3, window_bounds = array<i64: 1, 8>}]} {
    %c0 = arith.constant 0 : index
    %c0_0 = arith.constant 0 : index
    %0 = vector.load %arg1[%c0, %c0_0] : memref<8x32xf32, #tpu.memory_space<vmem>>, vector<8x32xf32>
    %c0_1 = arith.constant 0 : index
    %c0_2 = arith.constant 0 : index
    %1 = vector.load %arg2[%c0_1, %c0_2] : memref<8x32xf32, #tpu.memory_space<vmem>>, vector<8x32xf32>
    %2 = tpu.transpose %0, [1, 0] : vector<8x32xf32> -> vector<32x8xf32>
    %cst = arith.constant dense<0.000000e+00> : vector<8x8xf32>
    %3 = tpu.matmul %1, %2, %cst {dimension_numbers = #tpu.dot_dimension_numbers<[1], [0], [0], [1], [0, 0, 1, 1], [], []>} : vector<8x32xf32>, vector<32x8xf32>, vector<8x8xf32> -> vector<8x8xf32>
    %4 = vector.extract_strided_slice %3 {offsets = [0, 0], sizes = [1, 8], strides = [1, 1]} : vector<8x8xf32> to vector<1x8xf32>
    %c0_3 = arith.constant 0 : index
    %c0_4 = arith.constant 0 : index
    %5 = vector.load %arg3[%c0_3, %c0_4] : memref<1x1xf32, #tpu.memory_space<vmem>>, vector<1x1xf32>
    %6 = vector.broadcast %5 : vector<1x1xf32> to vector<1x8xf32>
    %7 = arith.addf %4, %6 : vector<1x8xf32>
    %cst_5 = arith.constant 0.000000e+00 : f32
    %8 = vector.broadcast %cst_5 : f32 to vector<1x8xf32>
    %9 = arith.maximumf %7, %8 : vector<1x8xf32>
    %c0_6 = arith.constant 0 : index
    %c0_7 = arith.constant 0 : index
    %10 = vector.load %arg4[%c0_6, %c0_7] : memref<1x8xf32, #tpu.memory_space<vmem>>, vector<1x8xf32>
    tpu.vector_store %arg4[%c0_6, %c0_7], %9 {strides = array<i32>} : memref<1x8xf32, #tpu.memory_space<vmem>>, vector<1x8xf32>,
    return
  }
  func.func @transform_0(%arg0: i32) -> (i32, i32) {
    %c0_i32 = arith.constant 0 : i32
    %c0_i32_0 = arith.constant 0 : i32
    return %arg0, %c0_i32 : i32, i32
  }
  func.func @transform_1(%arg0: i32) -> (i32, i32) {
    %c0_i32 = arith.constant 0 : i32
    %c0_i32_0 = arith.constant 0 : i32
    %c0_i32_1 = arith.constant 0 : i32
    return %c0_i32, %c0_i32_0 : i32, i32
  }
  func.func @transform_2(%arg0: i32) -> (i32, i32) {
    %c0_i32 = arith.constant 0 : i32
    %c0_i32_0 = arith.constant 0 : i32
    %c0_i32_1 = arith.constant 0 : i32
    return %c0_i32, %c0_i32_0 : i32, i32
  }
  func.func @transform_3(%arg0: i32) -> (i32, i32) {
    %c0_i32 = arith.constant 0 : i32
    %c0_i32_0 = arith.constant 0 : i32
    return %c0_i32, %arg0 : i32, i32
  }
}

</mosaic_0001>

<llo_original>
// kernel: tpu_custom_call.1
$region0: #{tpu_custom_call.1}
  #allocation0 [shape = 'u32[]', space=smem, size = 0x4, offset = 0x4, fixed_abs, tag = 'smem constant byte address 0x4 - core index']
  #allocation1 [shape = 'u32[72,128]{1,0:T(1,128)}', space=vmem, size = 0x9000, scoped, tag = 'internal scratch']
  #allocation2 [shape = 'f32[1,1]{1,0:T(1,128)S(1)}', space=vmem, size = 0x200, scoped, tag = 'scoped memory for tpu_custom_call.1']
  %s0 = inlined_call_operand.hbm [shape: f32[8,32], index: 0, kind: input, shape index: {}]
  %s1 = inlined_call_operand.hbm [shape: f32[8,32], index: 1, kind: input, shape index: {}]
  %s2 = inlined_call_operand.<no memory space> [shape: f32[1,1], index: 2, kind: input, shape index: {}]
  %s3 = inlined_call_operand.hbm [shape: f32[1,8], index: 3, kind: output, shape index: {}]
  %s4 = sld [smem:[#allocation0]]
  $region30: #{tpu_custom_call.1} parent=0
    _
  %s6 = ssub.s32 1, %s4
  %s7 = scalar_select 0, %s6, %s4
  %v8 = vstv %s2
  %9 = vst [vmem:[#allocation2] sm:$0x1] %v8
  $region1: #{tpu_custom_call.1} parent=0
    #allocation3 [shape = 'u8[4096]{0}', space=vmem, size = 0x1000, scoped, tag = 'input window, operand 0, single buffered']
    #allocation4 [shape = 's32[1]{0}', space=sflag, size = 0x4, scoped, tag = 'scoped memory for tpu_custom_call.1']
    #allocation5 [shape = 's32[1]{0}', space=sflag, size = 0x4, scoped, tag = 'scoped memory for tpu_custom_call.1']
    #allocation6 [shape = 'u8[4096]{0}', space=vmem, size = 0x1000, scoped, tag = 'input window, operand 1, single buffered']
    #allocation7 [shape = 's32[1]{0}', space=sflag, size = 0x4, scoped, tag = 'scoped memory for tpu_custom_call.1']
    #allocation8 [shape = 'u8[512]{0}', space=vmem, size = 0x400, scoped, tag = 'output window, operand 0, single buffered']
    %10 = vsyncpa [#allocation4], 0
    %11 = vsyncpa [#allocation7], 0
    %12 = vsyncpa [#allocation5], 0
    // Predicated region
    $region2: #{tpu_custom_call.1} parent=1 // pred_check
      _
    $region3: #{tpu_custom_call.1} parent=1 // pred_check_branch
      %14 = sbr.rel (0) target = $region5
    $region4: #{tpu_custom_call.1} parent=1 // pred_region
      %16 = vsyncadd [#allocation4], 0
      %s18 = sshll.u32 %s0, 4
      %s19 = int_to_ptr.hbm [resolvable:$true] %s18
      %s20 = sshll.u32 [#allocation3], 4
      %s21 = int_to_ptr.vmem [resolvable:$true] %s20
      %23 = dma.hbm_to_vmem [thread:$0]  %s19, 128, %s21, [#allocation4]
    $region5: #{tpu_custom_call.1} parent=1 // pred_fallthru
      _
    // Predicated region
    $region6: #{tpu_custom_call.1} parent=1 // pred_check
      _
    $region7: #{tpu_custom_call.1} parent=1 // pred_check_branch
      %25 = sbr.rel (0) target = $region9
    $region8: #{tpu_custom_call.1} parent=1 // pred_region
      %27 = vsyncadd [#allocation7], 0
      %s29 = sshll.u32 %s1, 4
      %s30 = int_to_ptr.hbm [resolvable:$true] %s29
      %s31 = sshll.u32 [#allocation6], 4
      %s32 = int_to_ptr.vmem [resolvable:$true] %s31
      %34 = dma.hbm_to_vmem [thread:$0]  %s30, 128, %s32, [#allocation7]
    $region9: #{tpu_custom_call.1} parent=1 // pred_fallthru
      _
    // Predicated region
    $region10: #{tpu_custom_call.1} parent=1 // pred_check
      _
    $region11: #{tpu_custom_call.1} parent=1 // pred_check_branch
      %36 = sbr.rel (0) target = $region13
    $region12: #{tpu_custom_call.1} parent=1 // pred_region
      _
    $region13: #{tpu_custom_call.1} parent=1 // pred_fallthru
      _
    // Predicated region
    $region14: #{tpu_custom_call.1} parent=1 // pred_check
      _
    $region15: #{tpu_custom_call.1} parent=1 // pred_check_branch
      %38 = sbr.rel (0) target = $region17
    $region16: #{tpu_custom_call.1} parent=1 // pred_region
      %40 = dma.done [#allocation4], 128
    $region17: #{tpu_custom_call.1} parent=1 // pred_fallthru
      _
    // Predicated region
    $region18: #{tpu_custom_call.1} parent=1 // pred_check
      _
    $region19: #{tpu_custom_call.1} parent=1 // pred_check_branch
      %42 = sbr.rel (0) target = $region21
    $region20: #{tpu_custom_call.1} parent=1 // pred_region
      %44 = dma.done [#allocation7], 128
    $region21: #{tpu_custom_call.1} parent=1 // pred_fallthru
      _
    %v45 = vld [vmem:[#allocation3] sm:$0xff]
    %v46 = vld [vmem:[#allocation6] sm:$0xff]
    %vm47 = vcmask 261120
    %v49 = vsel %vm47, %v46, 0
    %v52 = vsel %vm47, %v45, 0
    %54 = vmatpush.xpose.msra.mxu0 0.0
    %55 = vmatpush.xpose.msra.mxu0 0.0
    %56 = vmatpush.xpose.msra.mxu0 0.0
    %57 = vmatpush.xpose.msra.mxu0 0.0
    %58 = vmatpush.xpose.msra.mxu0 0.0
    %59 = vmatpush.xpose.msra.mxu0 0.0
    %60 = vmatpush.xpose.msra.mxu0 0.0
    %61 = vmatpush.xpose.msra.mxu0 0.0
    %62 = vmatpush.xpose.msra.mxu0 0.0
    %63 = vmatpush.xpose.msra.mxu0 0.0
    %64 = vmatpush.xpose.msra.mxu0 0.0
    %65 = vmatpush.xpose.msra.mxu0 0.0
    %66 = vmatpush.xpose.msra.mxu0 0.0
    %67 = vmatpush.xpose.msra.mxu0 0.0
    %68 = vmatpush.xpose.msra.mxu0 0.0
    %69 = vmatpush.xpose.msra.mxu0 %v52
    %70 = vmatmul.f32.gmra.mxu0 %v49
    %v71 = vpop.f32.mrf.mxu0
    %v72 = vadd.f32 0.0, %v71
    %73 = vdwg.mxu0
    %v74 = vld [vmem:[#allocation2] sm:$0x1]
    %76 = vset.pattern.permute.xlu0 0
    %77 = vperm.xlu0 %76, %v74
    %v78 = vpop.permute.xlu0 %77
    %v80 = vperm.slane %v78, 0
    %v81 = vadd.f32 %v72, %v80
    %v82 = vmax.f32 %v81, 0.0
    %vm83 = vcmask 57344
    %84 = vst.msk [vmem:[#allocation8] sm:$0x1] %vm83, %v82
    // Predicated region
    $region22: #{tpu_custom_call.1} parent=1 // pred_check
      _
    $region23: #{tpu_custom_call.1} parent=1 // pred_check_branch
      %86 = sbr.rel (0) target = $region25
    $region24: #{tpu_custom_call.1} parent=1 // pred_region
      %88 = vsyncadd [#allocation5], 0
      %s90 = sshll.u32 [#allocation8], 4
      %s91 = int_to_ptr.vmem [resolvable:$true] %s90
      %s92 = sshll.u32 %s3, 4
      %s93 = int_to_ptr.hbm [resolvable:$true] %s92
      %95 = dma.vmem_to_hbm [thread:$0]  %s91, 16, %s93, [#allocation5]
    $region25: #{tpu_custom_call.1} parent=1 // pred_fallthru
      _
    // Predicated region
    $region26: #{tpu_custom_call.1} parent=1 // pred_check
      _
    $region27: #{tpu_custom_call.1} parent=1 // pred_check_branch
      %97 = sbr.rel (0) target = $region29
    $region28: #{tpu_custom_call.1} parent=1 // pred_region
      %99 = dma.done [#allocation5], 16
    $region29: #{tpu_custom_call.1} parent=1 // pred_fallthru
      _
    %100 = vsyncpa [#allocation4], 1
    %101 = vsyncpa [#allocation7], 1
    %102 = vsyncpa [#allocation5], 1

</llo_original>
